<compile_context>
chip_gen: v6e
topology: v6e:2x2x1
jax: 0.10.0
libtpu: 0.0.40
codegen_flags: <defaults>
</compile_context>

<pallas_src>
import math

import jax
import jax.numpy as jnp
from jax.experimental import pallas as pl
from jax.experimental.pallas import tpu as pltpu


def _sinusoidal_pos_emb_kernel(wtab_ref, cos_sel_ref, x_ref, out_ref):
    # wtab_ref:    (p, W) f32 resident table; row j holds the frequency pattern
    #              [f_0..f_{h-1}, f_0..f_{h-1}] in lane-group j and 0 elsewhere.
    # cos_sel_ref: (1, W) f32 resident selector; 1.0 on cos lanes, 0.0 on sin lanes.
    # x_ref:       (tb, p) f32 -- p timesteps packed per packed-row.
    # out_ref:     (tb, W) f32 -- lane-dense packed [sin | cos] groups.
    p = wtab_ref.shape[0]

    # arg[r, j*dim + m] = x[r, j] * f_{m mod h}, built as p unrolled VPU
    # rank-1 broadcast-multiply-adds (exact f32; all other terms are exact 0).
    arg = x_ref[:, 0:1] * wtab_ref[0:1, :]
    for j in range(1, p):                      # static unroll, p <= 8
        arg = arg + x_ref[:, j:j + 1] * wtab_ref[j:j + 1, :]

    # Exact cos (no phase-shift approximation): select per lane.
    c = cos_sel_ref[...]                       # (1, W), broadcasts over rows
    out_ref[...] = jnp.sin(arg) * (1.0 - c) + jnp.cos(arg) * c


def sinusoidal_pos_emb(x, dim, *, target_block_bytes=2 * 1024 * 1024):
    """x: (B,) float timesteps -> (B, dim) float32 embedding.

    Matches: emb = cat(sin(x*f), cos(x*f)), f = exp(arange(d/2) * -ln(1e4)/(d/2-1))
    """
    assert dim % 2 == 0 and dim > 2, "dim must be even and > 2"
    half_dim = dim // 2
    b = x.shape[0]

    # Lane-packing factor: p batch rows per 128-lane output row (capped at 8
    # to bound the unrolled VPU work for tiny dims).
    p = max(1, min(8, 128 // dim))
    w = p * dim                                 # packed row width (lanes)

    # --- precomputed tables (wrapper-side, hoisted out of the kernel) -------
    scale = math.log(10000.0) / (half_dim - 1)
    freqs = jnp.exp(jnp.arange(half_dim, dtype=jnp.float32) * (-scale))  # (h,)
    lane_freq = jnp.concatenate([freqs, freqs])                          # (dim,)
    # Block-masked frequency table: wtab[j, j*dim:(j+1)*dim] = lane_freq.
    wtab = (jnp.eye(p, dtype=jnp.float32)[:, :, None]
            * lane_freq[None, None, :]).reshape(p, w)
    # Cos-lane selector (second half of each dim-group).
    cos_sel = jnp.tile(
        jnp.concatenate([jnp.zeros((half_dim,), jnp.float32),
                         jnp.ones((half_dim,), jnp.float32)]), p).reshape(1, w)

    # --- pack timesteps: (B,) -> (n_rows, p) --------------------------------
    n_rows = -(-b // p)
    pack_pad = n_rows * p - b                   # <= p-1 scalar elements
    xf = x.astype(jnp.float32)
    if pack_pad:
        xf = jnp.pad(xf, (0, pack_pad))
    x2 = xf.reshape(n_rows, p)

    # --- block sizing: ~target_block_bytes of output per grid step ----------
    bytes_per_row = w * 4
    target_rows = max(8, (target_block_bytes // bytes_per_row) // 8 * 8)
    if n_rows <= target_rows:
        tb = n_rows                             # single block (== full dim, ok)
        grid = (1,)
    else:
        tb = target_rows                        # multiple of 8
        grid = (pl.cdiv(n_rows, tb),)           # ragged final block is masked

    cost = pl.CostEstimate(
        flops=int(n_rows * w * (2 * p + 3)),
        transcendentals=int(2 * n_rows * w),
        bytes_accessed=int(n_rows * w * 4 + n_rows * p * 4 + (p + 1) * w * 4),
    )

    out = pl.pallas_call(
        _sinusoidal_pos_emb_kernel,
        out_shape=jax.ShapeDtypeStruct((n_rows, w), jnp.float32),
        grid_spec=pltpu.PrefetchScalarGridSpec(
            num_scalar_prefetch=0,
            grid=grid,
            in_specs=[
                pl.BlockSpec((p, w), lambda i: (0, 0)),    # resident freq table
                pl.BlockSpec((1, w), lambda i: (0, 0)),    # resident cos selector
                pl.BlockSpec((tb, p), lambda i: (i, 0)),   # packed timesteps tile
            ],
            out_specs=pl.BlockSpec((tb, w), lambda i: (i, 0)),
        ),
        compiler_params=pltpu.CompilerParams(
            dimension_semantics=("parallel",),
        ),
        cost_estimate=cost,
    )(wtab, cos_sel, x2)

    # Row-major view back to (n_rows*p, dim): free bitcast reshape.
    out = out.reshape(n_rows * p, dim)
    # Trailing slice only needed when B % p != 0 (tiny; unavoidable with packing).
    return out[:b] if pack_pad else out


def _reference(x, dim):
    half_dim = dim // 2
    emb = math.log(10000.0) / (half_dim - 1)
    emb = jnp.exp(jnp.arange(half_dim, dtype=jnp.float32) * -emb)
    emb = x.astype(jnp.float32)[:, None] * emb[None, :]
    return jnp.concatenate([jnp.sin(emb), jnp.cos(emb)], axis=-1)


if __name__ == "__main__":
    dim = 32  # module's `dim`

    # Case 1: small batch divisible by the packing factor (p=4).
    b1 = 8
    x1 = jax.random.uniform(jax.random.PRNGKey(0), (b1,), jnp.float32,
                            minval=0.0, maxval=1000.0)
    o1 = jax.block_until_ready(sinusoidal_pos_emb(x1, dim))
    r1 = _reference(x1, dim)
    assert o1.shape == (b1, dim), o1.shape
    assert jnp.allclose(o1, r1, atol=1e-5, rtol=1e-5), float(jnp.max(jnp.abs(o1 - r1)))

    # Case 2: batch NOT divisible by p (exercises pack padding + final slice).
    b2 = 21
    x2 = jax.random.uniform(jax.random.PRNGKey(1), (b2,), jnp.float32,
                            minval=0.0, maxval=1000.0)
    o2 = jax.block_until_ready(sinusoidal_pos_emb(x2, dim))
    r2 = _reference(x2, dim)
    assert o2.shape == (b2, dim), o2.shape
    assert jnp.allclose(o2, r2, atol=1e-5, rtol=1e-5), float(jnp.max(jnp.abs(o2 - r2)))

    # Case 3: multi-step grid with a ragged final block (tiny block override).
    b3 = 100
    x3 = jax.random.uniform(jax.random.PRNGKey(2), (b3,), jnp.float32,
                            minval=0.0, maxval=1000.0)
    o3 = jax.block_until_ready(sinusoidal_pos_emb(x3, dim, target_block_bytes=4096))
    r3 = _reference(x3, dim)
    assert o3.shape == (b3, dim), o3.shape
    assert jnp.allclose(o3, r3, atol=1e-5, rtol=1e-5), float(jnp.max(jnp.abs(o3 - r3)))

    print("KERNEL_OK")
</pallas_src>

<mosaic_0001>
module attributes {stable_mosaic.version = 11 : i64} {
  func.func @_sinusoidal_pos_emb_kernel(%arg0: i32, %arg1: memref<4x128xf32, #tpu.memory_space<vmem>>, %arg2: memref<1x128xf32, #tpu.memory_space<vmem>>, %arg3: memref<2x4xf32, #tpu.memory_space<vmem>>, %arg4: memref<2x128xf32, #tpu.memory_space<vmem>>) attributes {dimension_semantics = [#tpu.dimension_semantics<parallel>], iteration_bounds = array<i64: 1>, scalar_prefetch = 0 : i64, scratch_operands = 0 : i64, tpu.core_type = #tpu.core_type<tc>, window_params = [{pipeline_mode = #tpu.pipeline_mode<synchronous>, transform_indices = @transform_0, window_bounds = array<i64: 4, 128>}, {pipeline_mode = #tpu.pipeline_mode<synchronous>, transform_indices = @transform_1, window_bounds = array<i64: 1, 128>}, {transform_indices = @transform_2, window_bounds = array<i64: 2, 4>}, {transform_indices = @transform_3, window_bounds = array<i64: 2, 128>}]} {
    %c0 = arith.constant 0 : index
    %c0_0 = arith.constant 0 : index
    %0 = vector.load %arg3[%c0, %c0_0] : memref<2x4xf32, #tpu.memory_space<vmem>>, vector<2x1xf32>
    %c0_1 = arith.constant 0 : index
    %c0_2 = arith.constant 0 : index
    %1 = vector.load %arg1[%c0_1, %c0_2] : memref<4x128xf32, #tpu.memory_space<vmem>>, vector<1x128xf32>
    %2 = vector.broadcast %0 : vector<2x1xf32> to vector<2x128xf32>
    %3 = vector.broadcast %1 : vector<1x128xf32> to vector<2x128xf32>
    %4 = arith.mulf %2, %3 : vector<2x128xf32>
    %c0_3 = arith.constant 0 : index
    %c1 = arith.constant 1 : index
    %5 = vector.load %arg3[%c0_3, %c1] : memref<2x4xf32, #tpu.memory_space<vmem>>, vector<2x1xf32>
    %c1_4 = arith.constant 1 : index
    %c0_5 = arith.constant 0 : index
    %6 = vector.load %arg1[%c1_4, %c0_5] : memref<4x128xf32, #tpu.memory_space<vmem>>, vector<1x128xf32>
    %7 = vector.broadcast %5 : vector<2x1xf32> to vector<2x128xf32>
    %8 = vector.broadcast %6 : vector<1x128xf32> to vector<2x128xf32>
    %9 = arith.mulf %7, %8 : vector<2x128xf32>
    %10 = arith.addf %4, %9 : vector<2x128xf32>
    %c0_6 = arith.constant 0 : index
    %c2 = arith.constant 2 : index
    %11 = vector.load %arg3[%c0_6, %c2] : memref<2x4xf32, #tpu.memory_space<vmem>>, vector<2x1xf32>
    %c2_7 = arith.constant 2 : index
    %c0_8 = arith.constant 0 : index
    %12 = vector.load %arg1[%c2_7, %c0_8] : memref<4x128xf32, #tpu.memory_space<vmem>>, vector<1x128xf32>
    %13 = vector.broadcast %11 : vector<2x1xf32> to vector<2x128xf32>
    %14 = vector.broadcast %12 : vector<1x128xf32> to vector<2x128xf32>
    %15 = arith.mulf %13, %14 : vector<2x128xf32>
    %16 = arith.addf %10, %15 : vector<2x128xf32>
    %c0_9 = arith.constant 0 : index
    %c3 = arith.constant 3 : index
    %17 = vector.load %arg3[%c0_9, %c3] : memref<2x4xf32, #tpu.memory_space<vmem>>, vector<2x1xf32>
    %c3_10 = arith.constant 3 : index
    %c0_11 = arith.constant 0 : index
    %18 = vector.load %arg1[%c3_10, %c0_11] : memref<4x128xf32, #tpu.memory_space<vmem>>, vector<1x128xf32>
    %19 = vector.broadcast %17 : vector<2x1xf32> to vector<2x128xf32>
    %20 = vector.broadcast %18 : vector<1x128xf32> to vector<2x128xf32>
    %21 = arith.mulf %19, %20 : vector<2x128xf32>
    %22 = arith.addf %16, %21 : vector<2x128xf32>
    %c0_12 = arith.constant 0 : index
    %c0_13 = arith.constant 0 : index
    %23 = vector.load %arg2[%c0_12, %c0_13] : memref<1x128xf32, #tpu.memory_space<vmem>>, vector<1x128xf32>
    %24 = math.sin %22 : vector<2x128xf32>
    %cst = arith.constant 1.000000e+00 : f32
    %25 = vector.broadcast %cst : f32 to vector<1x128xf32>
    %26 = arith.subf %25, %23 : vector<1x128xf32>
    %27 = vector.broadcast %26 : vector<1x128xf32> to vector<2x128xf32>
    %28 = arith.mulf %24, %27 : vector<2x128xf32>
    %29 = math.cos %22 : vector<2x128xf32>
    %30 = vector.broadcast %23 : vector<1x128xf32> to vector<2x128xf32>
    %31 = arith.mulf %29, %30 : vector<2x128xf32>
    %32 = arith.addf %28, %31 : vector<2x128xf32>
    %c0_14 = arith.constant 0 : index
    %c0_15 = arith.constant 0 : index
    %33 = vector.load %arg4[%c0_14, %c0_15] : memref<2x128xf32, #tpu.memory_space<vmem>>, vector<2x128xf32>
    tpu.vector_store %arg4[%c0_14, %c0_15], %32 {strides = array<i32>} : memref<2x128xf32, #tpu.memory_space<vmem>>, vector<2x128xf32>,
    return
  }
  func.func @transform_0(%arg0: i32) -> (i32, i32) {
    %c0_i32 = arith.constant 0 : i32
    %c0_i32_0 = arith.constant 0 : i32
    %c0_i32_1 = arith.constant 0 : i32
    return %c0_i32, %c0_i32_0 : i32, i32
  }
  func.func @transform_1(%arg0: i32) -> (i32, i32) {
    %c0_i32 = arith.constant 0 : i32
    %c0_i32_0 = arith.constant 0 : i32
    %c0_i32_1 = arith.constant 0 : i32
    return %c0_i32, %c0_i32_0 : i32, i32
  }
  func.func @transform_2(%arg0: i32) -> (i32, i32) {
    %c0_i32 = arith.constant 0 : i32
    %c0_i32_0 = arith.constant 0 : i32
    return %arg0, %c0_i32 : i32, i32
  }
  func.func @transform_3(%arg0: i32) -> (i32, i32) {
    %c0_i32 = arith.constant 0 : i32
    %c0_i32_0 = arith.constant 0 : i32
    return %arg0, %c0_i32 : i32, i32
  }
}

</mosaic_0001>

<llo_original>
// kernel: tpu_custom_call.1
$region0: #{tpu_custom_call.1}
  #allocation0 [shape = 'u32[]', space=smem, size = 0x4, offset = 0x4, fixed_abs, tag = 'smem constant byte address 0x4 - core index']
  #allocation1 [shape = 'u32[144,128]{1,0:T(1,128)}', space=vmem, size = 0x12000, scoped, tag = 'internal scratch']
  %s0 = inlined_call_operand.hbm [shape: f32[4,128], index: 0, kind: input, shape index: {}]
  %s1 = inlined_call_operand.vmem [shape: f32[1,128], index: 1, kind: input, shape index: {}]
  %s2 = inlined_call_operand.vmem [shape: f32[2,4], index: 2, kind: input, shape index: {}]
  %s3 = inlined_call_operand.hbm [shape: f32[2,128], index: 3, kind: output, shape index: {}]
  %s4 = sld [smem:[#allocation0]]
  $region26: #{tpu_custom_call.1} parent=0
    _
  %s6 = ssub.s32 1, %s4
  %s7 = scalar_select 0, %s6, %s4
  $region1: #{tpu_custom_call.1} parent=0
    #allocation2 [shape = 'u8[2048]{0}', space=vmem, size = 0x800, scoped, tag = 'input window, operand 0, single buffered']
    #allocation3 [shape = 's32[1]{0}', space=sflag, size = 0x4, scoped, tag = 'scoped memory for tpu_custom_call.1']
    #allocation4 [shape = 's32[1]{0}', space=sflag, size = 0x4, scoped, tag = 'scoped memory for tpu_custom_call.1']
    #allocation5 [shape = 'u8[1024]{0}', space=vmem, size = 0x400, scoped, tag = 'output window, operand 0, single buffered']
    %8 = vsyncpa [#allocation3], 0
    %9 = vsyncpa [#allocation4], 0
    // Predicated region
    $region2: #{tpu_custom_call.1} parent=1 // pred_check
      _
    $region3: #{tpu_custom_call.1} parent=1 // pred_check_branch
      %11 = sbr.rel (0) target = $region5
    $region4: #{tpu_custom_call.1} parent=1 // pred_region
      %s13 = ssub.s32 64, 64
      %14 = vsyncadd [#allocation3], %s13
      %s16 = sshll.u32 [#allocation2], 4
      %s17 = int_to_ptr.vmem [resolvable:$true] %s16
      %19 = dma.hbm_to_vmem [thread:$0]  %s0, 64, %s17, [#allocation3]
    $region5: #{tpu_custom_call.1} parent=1 // pred_fallthru
      _
    // Predicated region
    $region6: #{tpu_custom_call.1} parent=1 // pred_check
      _
    $region7: #{tpu_custom_call.1} parent=1 // pred_check_branch
      %21 = sbr.rel (0) target = $region9
    $region8: #{tpu_custom_call.1} parent=1 // pred_region
      _
    $region9: #{tpu_custom_call.1} parent=1 // pred_fallthru
      _
    // Predicated region
    $region10: #{tpu_custom_call.1} parent=1 // pred_check
      _
    $region11: #{tpu_custom_call.1} parent=1 // pred_check_branch
      %23 = sbr.rel (0) target = $region13
    $region12: #{tpu_custom_call.1} parent=1 // pred_region
      _
    $region13: #{tpu_custom_call.1} parent=1 // pred_fallthru
      _
    // Predicated region
    $region14: #{tpu_custom_call.1} parent=1 // pred_check
      _
    $region15: #{tpu_custom_call.1} parent=1 // pred_check_branch
      %25 = sbr.rel (0) target = $region17
    $region16: #{tpu_custom_call.1} parent=1 // pred_region
      %26 = dma.done [#allocation3], 64
    $region17: #{tpu_custom_call.1} parent=1 // pred_fallthru
      _
    %v27 = vld [vmem:[%s2] sm:$0x3]
    %v28 = vld [vmem:[#allocation2] sm:$0x1]
    %30 = vset.pattern.permute.xlu0 0
    %31 = vperm.xlu0 %30, %v27
    %v32 = vpop.permute.xlu0 %31
    %v34 = vlaneseq
    %v35 = vshrl.u32 %v34, 7
    %v36 = vsub.s32 0, %v35
    %v37 = vrot.slane %v28, %v36
    %v38 = vmul.f32 %v32, %v37
    %v39 = vld [vmem:[#allocation2 + $0x1] sm:$0x1]
    %40 = vset.pattern.permute.xlu0 1
    %41 = vperm.xlu0 %40, %v27
    %v42 = vpop.permute.xlu0 %41
    %v44 = vlaneseq
    %v45 = vshrl.u32 %v44, 7
    %v46 = vsub.s32 0, %v45
    %v47 = vrot.slane %v39, %v46
    %v48 = vmul.f32 %v42, %v47
    %v49 = vadd.f32 %v38, %v48
    %v50 = vld [vmem:[#allocation2 + $0x2] sm:$0x1]
    %51 = vset.pattern.permute.xlu0 2
    %52 = vperm.xlu0 %51, %v27
    %v53 = vpop.permute.xlu0 %52
    %v55 = vlaneseq
    %v56 = vshrl.u32 %v55, 7
    %v57 = vsub.s32 0, %v56
    %v58 = vrot.slane %v50, %v57
    %v59 = vmul.f32 %v53, %v58
    %v60 = vadd.f32 %v49, %v59
    %v61 = vld [vmem:[#allocation2 + $0x3] sm:$0x1]
    %62 = vset.pattern.permute.xlu0 3
    %63 = vperm.xlu0 %62, %v27
    %v64 = vpop.permute.xlu0 %63
    %v66 = vlaneseq
    %v67 = vshrl.u32 %v66, 7
    %v68 = vsub.s32 0, %v67
    %v69 = vrot.slane %v61, %v68
    %v70 = vmul.f32 %v64, %v69
    %v71 = vadd.f32 %v60, %v70
    %v72 = vld [vmem:[%s1] sm:$0x1]
    %v73 = vand.u32 2147483647, %v71
    %vm74 = vcmp.le.f32.partialorder %v73, 0.7853982
    %vm75 = vcmp.lt.s32.totalorder %v71, 0
    %v76 = vand.u32 %v71, 2139095040
    %v77 = vshrl.u32 %v76, 23
    %v78 = vsub.s32 %v77, 127
    %v79 = vand.u32 2147483647, %v71
    %v80 = vand.u32 %v79, 8388607
    %v81 = vor.u32 %v80, 8388608
    %v82 = vsub.s32 0, %v81
    %v83 = vadd.s32 %v78, 1
    %vm84 = vcmp.gt.s32.totalorder %v83, 0
    %v85 = vsel %vm84, %v83, 0
    %v86 = vshrl.u32 %v85, 5
    %v87 = vand.u32 %v85, 31
    %v88 = vsub.s32 32, %v87
    %v89 = vshrl.u32 683565275, %v88
    %v90 = vshll.u32 683565275, %v87
    %v91 = vshrl.u32 2475754826, %v88
    %v92 = vor.u32 %v90, %v91
    %v93 = vshll.u32 2475754826, %v87
    %v94 = vshrl.u32 2131351028, %v88
    %v95 = vor.u32 %v93, %v94
    %v96 = vshll.u32 2131351028, %v87
    %v97 = vshrl.u32 2102212464, %v88
    %v98 = vor.u32 %v96, %v97
    %v99 = vshll.u32 2102212464, %v87
    %v100 = vshrl.u32 920167782, %v88
    %v101 = vor.u32 %v99, %v100
    %v102 = vshll.u32 920167782, %v87
    %v103 = vshrl.u32 1326507024, %v88
    %v104 = vor.u32 %v102, %v103
    %vm105 = vcmp.lt.s32.totalorder %v86, 1
    %vm106 = vcmp.lt.s32.totalorder %v86, 2
    %vm107 = vcmp.lt.s32.totalorder %v86, 3
    %vm108 = vcmp.lt.s32.totalorder %v86, 4
    %v109 = vsel %vm105, %v89, %v92
    %v110 = vsel %vm108, %v98, 2102212464
    %v111 = vsel %vm107, %v95, %v110
    %v112 = vsel %vm106, %v109, %v111
    %v113 = vsel %vm105, %v92, %v95
    %v114 = vsel %vm108, %v101, 920167782
    %v115 = vsel %vm107, %v98, %v114
    %v116 = vsel %vm106, %v113, %v115
    %v117 = vsel %vm105, %v95, %v98
    %v118 = vsel %vm108, %v104, 1326507024
    %v119 = vsel %vm107, %v101, %v118
    %v120 = vsel %vm106, %v117, %v119
    %v121 = vshll.u32 %v81, 8
    %v122 = vmul.u32.u64.compose %v121, %v120
    %v123 = vextract.low.u32 %v122
    %v124 = vextract.high.u32 %v122
    %v125 = vmul.u32.u64.compose %v121, %v116
    %v126 = vextract.low.u32 %v125
    %v127 = vextract.high.u32 %v125
    %v128 = vmul.u32 %v121, %v112
    %v129 = vadd.s32 %v124, %v126
    %vm130 = vc.u32 %v124, %v126
    %v131 = vadd.s32 %v127, 1
    %v132 = vsel %vm130, %v131, %v127
    %v133 = vadd.s32 %v128, %v132
    %v134 = vadd.s32 %v133, 536870912
    %v135 = vshrl.u32 %v134, 30
    %v136 = vshll.u32 %v135, 30
    %v137 = vsub.s32 %v133, %v136
    %vm138 = vcmp.lt.s32.totalorder %v137, 0
    %v139 = vsub.s32 0, %v137
    %v140 = vsel %vm138, %v139, %v137
    %v141 = vclz %v140
    %v142 = vsub.s32 %v141, 2
    %vm143 = vcmp.gt.s32.totalorder 0, %v142
    %v144 = vsel %vm143, 0, %v142
    %v145 = vsub.s32 32, %v144
    %v146 = vshll.u32 %v137, %v144
    %v147 = vshrl.u32 %v129, %v145
    %v148 = vor.u32 %v146, %v147
    %v149 = vsub.s32 4294967266, %v144
    %v150 = vadd.s32 %v149, 127
    %v151 = vshll.u32 %v150, 23
    %v152 = vor.u32 4788187, %v151
    %v153 = vand.u32 2147483647, %v152
    %v155 = vcvt.s32.f32 %v148
    %v156 = vmul.f32 %v155, %v153
    %v157 = vxor.u32 %v156, 2147483648
    %v158 = vsel %vm75, %v157, %v156
    %v159 = vsub.s32 4, %v135
    %v160 = vsel %vm75, %v159, %v135
    %v161 = vsel %vm74, %v71, %v158
    %v162 = vsel %vm74, 0, %v160
    %v163 = vcosq.f32.pop %v161
    %v164 = vsinq.f32.pop %v161
    %vm165 = vweird.f32 %v71
    %v166 = vadd.s32 %v162, 3
    %v167 = vand.u32 %v166, 3
    %vm168 = vcmp.lt.s32.totalorder %v167, 2
    %vm169 = vcmp.eq.s32.totalorder %v167, 0
    %v170 = vxor.u32 %v164, 2147483648
    %v171 = vsel %vm169, %v163, %v170
    %vm172 = vcmp.eq.s32.totalorder %v167, 2
    %v173 = vxor.u32 %v163, 2147483648
    %v174 = vsel %vm172, %v173, %v164
    %v175 = vsel %vm168, %v171, %v174
    %v176 = vsel %vm165, nan, %v175
    %v177 = vsub.f32 1.0, %v72
    %v179 = vlaneseq
    %v180 = vshrl.u32 %v179, 7
    %v181 = vsub.s32 0, %v180
    %v182 = vrot.slane %v177, %v181
    %v184 = vmul.f32 %v176, %v182
    %v185 = vand.u32 2147483647, %v71
    %vm186 = vcmp.le.f32.partialorder %v185, 0.7853982
    %vm187 = vcmp.lt.s32.totalorder %v71, 0
    %v188 = vand.u32 %v71, 2139095040
    %v189 = vshrl.u32 %v188, 23
    %v190 = vsub.s32 %v189, 127
    %v191 = vand.u32 2147483647, %v71
    %v192 = vand.u32 %v191, 8388607
    %v193 = vor.u32 %v192, 8388608
    %v194 = vsub.s32 0, %v193
    %v195 = vadd.s32 %v190, 1
    %vm196 = vcmp.gt.s32.totalorder %v195, 0
    %v197 = vsel %vm196, %v195, 0
    %v198 = vshrl.u32 %v197, 5
    %v199 = vand.u32 %v197, 31
    %v200 = vsub.s32 32, %v199
    %v201 = vshrl.u32 683565275, %v200
    %v202 = vshll.u32 683565275, %v199
    %v203 = vshrl.u32 2475754826, %v200
    %v204 = vor.u32 %v202, %v203
    %v205 = vshll.u32 2475754826, %v199
    %v206 = vshrl.u32 2131351028, %v200
    %v207 = vor.u32 %v205, %v206
    %v208 = vshll.u32 2131351028, %v199
    %v209 = vshrl.u32 2102212464, %v200
    %v210 = vor.u32 %v208, %v209
    %v211 = vshll.u32 2102212464, %v199
    %v212 = vshrl.u32 920167782, %v200
    %v213 = vor.u32 %v211, %v212
    %v214 = vshll.u32 920167782, %v199
    %v215 = vshrl.u32 1326507024, %v200
    %v216 = vor.u32 %v214, %v215
    %vm217 = vcmp.lt.s32.totalorder %v198, 1
    %vm218 = vcmp.lt.s32.totalorder %v198, 2
    %vm219 = vcmp.lt.s32.totalorder %v198, 3
    %vm220 = vcmp.lt.s32.totalorder %v198, 4
    %v221 = vsel %vm217, %v201, %v204
    %v222 = vsel %vm220, %v210, 2102212464
    %v223 = vsel %vm219, %v207, %v222
    %v224 = vsel %vm218, %v221, %v223
    %v225 = vsel %vm217, %v204, %v207
    %v226 = vsel %vm220, %v213, 920167782
    %v227 = vsel %vm219, %v210, %v226
    %v228 = vsel %vm218, %v225, %v227
    %v229 = vsel %vm217, %v207, %v210
    %v230 = vsel %vm220, %v216, 1326507024
    %v231 = vsel %vm219, %v213, %v230
    %v232 = vsel %vm218, %v229, %v231
    %v233 = vshll.u32 %v193, 8
    %v234 = vmul.u32.u64.compose %v233, %v232
    %v235 = vextract.low.u32 %v234
    %v236 = vextract.high.u32 %v234
    %v237 = vmul.u32.u64.compose %v233, %v228
    %v238 = vextract.low.u32 %v237
    %v239 = vextract.high.u32 %v237
    %v240 = vmul.u32 %v233, %v224
    %v241 = vadd.s32 %v236, %v238
    %vm242 = vc.u32 %v236, %v238
    %v243 = vadd.s32 %v239, 1
    %v244 = vsel %vm242, %v243, %v239
    %v245 = vadd.s32 %v240, %v244
    %v246 = vadd.s32 %v245, 536870912
    %v247 = vshrl.u32 %v246, 30
    %v248 = vshll.u32 %v247, 30
    %v249 = vsub.s32 %v245, %v248
    %vm250 = vcmp.lt.s32.totalorder %v249, 0
    %v251 = vsub.s32 0, %v249
    %v252 = vsel %vm250, %v251, %v249
    %v253 = vclz %v252
    %v254 = vsub.s32 %v253, 2
    %vm255 = vcmp.gt.s32.totalorder 0, %v254
    %v256 = vsel %vm255, 0, %v254
    %v257 = vsub.s32 32, %v256
    %v258 = vshll.u32 %v249, %v256
    %v259 = vshrl.u32 %v241, %v257
    %v260 = vor.u32 %v258, %v259
    %v261 = vsub.s32 4294967266, %v256
    %v262 = vadd.s32 %v261, 127
    %v263 = vshll.u32 %v262, 23
    %v264 = vor.u32 4788187, %v263
    %v265 = vand.u32 2147483647, %v264
    %v267 = vcvt.s32.f32 %v260
    %v268 = vmul.f32 %v267, %v265
    %v269 = vxor.u32 %v268, 2147483648
    %v270 = vsel %vm187, %v269, %v268
    %v271 = vsub.s32 4, %v247
    %v272 = vsel %vm187, %v271, %v247
    %v273 = vsel %vm186, %v71, %v270
    %v274 = vsel %vm186, 0, %v272
    %v275 = vcosq.f32.pop %v273
    %v276 = vsinq.f32.pop %v273
    %vm277 = vweird.f32 %v71
    %v278 = vand.u32 %v274, 3
    %vm279 = vcmp.lt.s32.totalorder %v278, 2
    %vm280 = vcmp.eq.s32.totalorder %v278, 0
    %v281 = vxor.u32 %v276, 2147483648
    %v282 = vsel %vm280, %v275, %v281
    %vm283 = vcmp.eq.s32.totalorder %v278, 2
    %v284 = vxor.u32 %v275, 2147483648
    %v285 = vsel %vm283, %v284, %v276
    %v286 = vsel %vm279, %v282, %v285
    %v287 = vsel %vm277, nan, %v286
    %v289 = vlaneseq
    %v290 = vshrl.u32 %v289, 7
    %v291 = vsub.s32 0, %v290
    %v292 = vrot.slane %v72, %v291
    %v294 = vmul.f32 %v287, %v292
    %v295 = vadd.f32 %v184, %v294
    %296 = vst [vmem:[#allocation5] sm:$0x3] %v295
    // Predicated region
    $region18: #{tpu_custom_call.1} parent=1 // pred_check
      _
    $region19: #{tpu_custom_call.1} parent=1 // pred_check_branch
      %298 = sbr.rel (0) target = $region21
    $region20: #{tpu_custom_call.1} parent=1 // pred_region
      %s300 = ssub.s32 32, 32
      %301 = vsyncadd [#allocation4], %s300
      %s303 = sshll.u32 [#allocation5], 4
      %s304 = int_to_ptr.vmem [resolvable:$true] %s303
      %306 = dma.vmem_to_hbm [thread:$0]  %s304, 32, %s3, [#allocation4]
    $region21: #{tpu_custom_call.1} parent=1 // pred_fallthru
      _
    // Predicated region
    $region22: #{tpu_custom_call.1} parent=1 // pred_check
      _
    $region23: #{tpu_custom_call.1} parent=1 // pred_check_branch
      %308 = sbr.rel (0) target = $region25
    $region24: #{tpu_custom_call.1} parent=1 // pred_region
      %309 = dma.done [#allocation4], 32
    $region25: #{tpu_custom_call.1} parent=1 // pred_fallthru
      _
    %310 = vsyncpa [#allocation3], 1
    %311 = vsyncpa [#allocation4], 1

</llo_original>
